<compile_context>
chip_gen: v6e
topology: v6e:2x2x1
jax: 0.10.0
libtpu: 0.0.40
codegen_flags: <defaults>
</compile_context>

<pallas_src>
import math

import jax
import jax.numpy as jnp
from jax.experimental import pallas as pl
from jax.experimental.pallas import tpu as pltpu

_GELU_C = math.sqrt(2.0 / math.pi)
_GELU_C3 = _GELU_C * 0.044715


# ----------------------------------------------------------------------------- kernels
def _gelu(h_f32, compute_dtype):
    """tanh-GELU with folded constants; polynomial in compute_dtype (bf16 on bf16 runs)."""
    h = h_f32.astype(compute_dtype)
    u = h * (_GELU_C + _GELU_C3 * (h * h))
    return (0.5 * h * (1.0 + jnp.tanh(u))).astype(compute_dtype)


def _ffn_kernel_resident(x_ref, w1_ref, b1_ref, w2_ref, b2_ref, o_ref):
    """Whole d_ff resident in VMEM: single pass, no accumulator scratch."""
    h = jnp.dot(x_ref[...], w1_ref[...], preferred_element_type=jnp.float32)
    h = h + b1_ref[...]                               # b1 kept in f32
    g = _gelu(h, w2_ref.dtype)
    # TODO(synk): nn.Dropout(p=0.1) is identity in eval mode; training-mode dropout
    # would use pltpu.prng_seed / pltpu.prng_random_bits here.
    y = jnp.dot(g, w2_ref[...], preferred_element_type=jnp.float32)
    o_ref[...] = (y + b2_ref[...]).astype(o_ref.dtype)


def _ffn_kernel_streamed(x_ref, w1_ref, b1_ref, w2_ref, b2_ref, o_ref, acc_ref):
    """One (row-tile, d_ff-tile) step; d_ff is an innermost reduction axis."""
    k = pl.program_id(1)

    @pl.when(k == 0)
    def _init():
        acc_ref[...] = jnp.zeros_like(acc_ref)

    h = jnp.dot(x_ref[...], w1_ref[...], preferred_element_type=jnp.float32)
    h = h + b1_ref[...]
    g = _gelu(h, w2_ref.dtype)
    acc_ref[...] += jnp.dot(g, w2_ref[...], preferred_element_type=jnp.float32)

    @pl.when(k == pl.num_programs(1) - 1)
    def _finalize():
        o_ref[...] = (acc_ref[...] + b2_ref[...]).astype(o_ref.dtype)


# ----------------------------------------------------------------------------- sizing
def _round_up(x, m):
    return ((x + m - 1) // m) * m


def _vmem_caps():
    """(tiling budget, hard cap on vmem_limit_bytes) — generation aware."""
    try:
        cap = int(pltpu.get_tpu_info().vmem_capacity_bytes)
    except Exception:                                  # noqa: BLE001 - conservative fallback
        cap = 64 * 1024 * 1024
    if cap <= 64 * 1024 * 1024:
        # v7x-class: 64 MiB per TensorCore; leave headroom for Mosaic internal scratch.
        return 44 * 1024 * 1024, 54 * 1024 * 1024
    # v5e/v6e: 128 MiB physical (default scoped limit is only 16/32 MiB).
    return 96 * 1024 * 1024, 100 * 1024 * 1024


def _vmem_bytes_estimate(tm, d_model, tf, itemsize, *, resident, single_buffer_weights):
    """Per-step VMEM footprint (pipeline buffers + scratch + in-kernel intermediates)."""
    wbuf = 1 if (resident and single_buffer_weights) else 2
    b = 0
    b += 2 * tm * d_model * itemsize                     # x tile (double-buffered)
    b += 2 * tm * d_model * itemsize                     # out tile (double-buffered)
    b += wbuf * 2 * d_model * tf * itemsize              # W1 + W2 tiles
    b += wbuf * (tf + d_model) * 4                       # biases (f32)
    if not resident:
        b += tm * d_model * 4                            # f32 accumulator scratch
    b += tm * tf * (4 + itemsize)                        # h (f32) + g (compute dtype)
    return b


def _pick_tm(m, row_tile, sub):
    """Sublane-aligned row tile; >=2 grid steps when possible (v7x megacore)."""
    if m <= sub:
        return m                                         # block == full (tiny) dim
    tm = min(_round_up(row_tile, sub), _round_up(m, sub))
    half = _round_up(pl.cdiv(m, 2), sub)                 # span both TensorCores
    return min(tm, half)


def _pick_dff_tile(d_ff, d_model, tm, itemsize, budget, single_buffer_weights):
    """Whole d_ff (resident weights) if it fits; else the largest MXU-aligned divisor."""
    if _vmem_bytes_estimate(tm, d_model, d_ff, itemsize, resident=True,
                            single_buffer_weights=single_buffer_weights) <= budget:
        return d_ff
    cands = []
    for step in (256, 128):                              # 256x256 MXU on v6e/v7x first
        top = (d_ff // step) * step
        cands += [t for t in range(top, 0, -step)
                  if d_ff % t == 0 and t != d_ff and t not in cands]
    for t in cands:
        if _vmem_bytes_estimate(tm, d_model, t, itemsize, resident=False,
                                single_buffer_weights=single_buffer_weights) <= budget:
            return t
    return cands[-1] if cands else d_ff                  # least-VMEM fallback


# ----------------------------------------------------------------------------- wrapper
def positionwise_feed_forward(x, w1, b1, w2, b2, *, row_tile=256, streaming_row_tile=512,
                              dff_tile=None, single_buffer_resident_weights=True):
    """x: (..., d_model) -> (..., d_model). w1: (d_model, d_ff), w2: (d_ff, d_model)."""
    orig_shape = x.shape
    d_model = orig_shape[-1]
    d_ff = w1.shape[1]
    assert w1.shape == (d_model, d_ff)
    assert w2.shape == (d_ff, d_model)

    x2d = x.reshape(-1, d_model)
    m = x2d.shape[0]
    itemsize = jnp.dtype(x.dtype).itemsize

    # Feed the MXU in the native activation dtype; biases in f32 for the adds.
    # TODO(synk): for bf16 activations this quantizes f32 weights to bf16 (intended
    # mixed-precision inference behaviour); pass pre-cast weights to opt out.
    w1 = w1.astype(x.dtype)
    w2 = w2.astype(x.dtype)
    b1_2d = b1.reshape(1, d_ff).astype(jnp.float32)
    b2_2d = b2.reshape(1, d_model).astype(jnp.float32)

    budget, limit_cap = _vmem_caps()
    sub = max(8, 32 // itemsize)                         # sublane packing: 8 f32 / 16 bf16

    # Single-buffering resident weights only pays off when they occupy real VMEM.
    w_bytes = 2 * d_model * d_ff * itemsize
    single_buf = bool(single_buffer_resident_weights) and w_bytes >= (2 << 20)

    # --- choose row tile & d_ff tile (prefer fully resident weights) -----------------
    tm = _pick_tm(m, row_tile, sub)
    if dff_tile is None:
        tf = _pick_dff_tile(d_ff, d_model, tm, itemsize, budget, single_buf)
        if tf != d_ff:
            # Weights must stream: re-fetched once per row tile, so raise tm toward 512
            # (arithmetic intensity ~ tm flop/B) and re-pick the d_ff tile.
            tm = _pick_tm(m, max(row_tile, streaming_row_tile), sub)
            tf = _pick_dff_tile(d_ff, d_model, tm, itemsize, budget, single_buf)
    else:
        tf = dff_tile
    assert d_ff % tf == 0, "dff_tile must divide d_ff"
    assert tf == d_ff or tf % 128 == 0, "partial d_ff tiles must be lane-aligned"

    resident = tf == d_ff
    n_rows = pl.cdiv(m, tm)
    n_k = d_ff // tf

    est = _vmem_bytes_estimate(tm, d_model, tf, itemsize, resident=resident,
                               single_buffer_weights=resident and single_buf)
    vmem_limit = int(min(max(int(1.25 * est), 32 * 1024 * 1024), limit_cap))

    # Advisory cost estimate; weights are re-fetched per row tile whenever they stream.
    weight_fetches = 1 if resident else n_rows
    cost = pl.CostEstimate(
        flops=4 * m * d_model * d_ff,                    # two matmuls, 2 flops/MAC
        transcendentals=m * d_ff,                        # tanh
        bytes_accessed=(2 * m * d_model) * itemsize
        + weight_fetches * (w1.size + w2.size) * itemsize
        + weight_fetches * (b1.size + b2.size) * 4,
    )

    def _call(use_single_buffer):
        w_mode = dict(pipeline_mode=pl.Buffered(1)) if use_single_buffer else {}
        if resident:
            grid = (n_rows,)
            in_specs = [
                pl.BlockSpec((tm, d_model), lambda i: (i, 0)),                    # x rows
                pl.BlockSpec((d_model, d_ff), lambda i: (0, 0), **w_mode),        # W1
                pl.BlockSpec((1, d_ff), lambda i: (0, 0), **w_mode),              # b1
                pl.BlockSpec((d_ff, d_model), lambda i: (0, 0), **w_mode),        # W2
                pl.BlockSpec((1, d_model), lambda i: (0, 0), **w_mode),           # b2
            ]
            out_spec = pl.BlockSpec((tm, d_model), lambda i: (i, 0))
            kernel, scratch, dims = _ffn_kernel_resident, [], ("parallel",)
        else:
            grid = (n_rows, n_k)                                                  # k last
            in_specs = [
                pl.BlockSpec((tm, d_model), lambda i, k: (i, 0)),                 # x rows
                pl.BlockSpec((d_model, tf), lambda i, k: (0, k)),                 # W1 slice
                pl.BlockSpec((1, tf), lambda i, k: (0, k)),                       # b1 slice
                pl.BlockSpec((tf, d_model), lambda i, k: (k, 0)),                 # W2 slice
                pl.BlockSpec((1, d_model), lambda i, k: (0, 0)),                  # b2
            ]
            out_spec = pl.BlockSpec((tm, d_model), lambda i, k: (i, 0))
            kernel = _ffn_kernel_streamed
            scratch = [pltpu.VMEM((tm, d_model), jnp.float32)]
            dims = ("parallel", "arbitrary")
        return pl.pallas_call(
            kernel,
            out_shape=jax.ShapeDtypeStruct((m, d_model), x.dtype),
            grid_spec=pltpu.PrefetchScalarGridSpec(
                num_scalar_prefetch=0,
                grid=grid,
                in_specs=in_specs,
                out_specs=out_spec,
                scratch_shapes=scratch,
            ),
            compiler_params=pltpu.CompilerParams(
                dimension_semantics=dims,
                vmem_limit_bytes=vmem_limit,
            ),
            cost_estimate=cost,
        )(x2d, w1, b1_2d, w2, b2_2d)

    if resident and single_buf:
        try:
            out = _call(True)
        except Exception:                                # noqa: BLE001
            # pipeline_mode=Buffered(1) unsupported on this jax build: fall back.
            out = _call(False)
    else:
        out = _call(False)

    return out.reshape(orig_shape)


# ----------------------------------------------------------------------------- reference / tests
def _reference(x, w1, b1, w2, b2):
    hp = jax.lax.Precision.HIGHEST
    h = jnp.dot(x, w1, precision=hp) + b1
    g = 0.5 * h * (1.0 + jnp.tanh(_GELU_C * (h + 0.044715 * h ** 3)))
    return jnp.dot(g, w2, precision=hp) + b2


if __name__ == "__main__":
    key = jax.random.PRNGKey(0)
    k_x, k_w1, k_b1, k_w2, k_b2, k_x2 = jax.random.split(key, 6)

    # ---- Test 1: f32, tiny dims -> resident-weights path, 2 row tiles ---------------
    batch, seq, d_model, d_ff = 2, 8, 32, 64
    x = jax.random.normal(k_x, (batch, seq, d_model), dtype=jnp.float32)
    lim1 = 1.0 / math.sqrt(d_model)
    lim2 = 1.0 / math.sqrt(d_ff)
    w1 = jax.random.uniform(k_w1, (d_model, d_ff), jnp.float32, -lim1, lim1)
    b1 = jax.random.uniform(k_b1, (d_ff,), jnp.float32, -lim1, lim1)
    w2 = jax.random.uniform(k_w2, (d_ff, d_model), jnp.float32, -lim2, lim2)
    b2 = jax.random.uniform(k_b2, (d_model,), jnp.float32, -lim2, lim2)

    y = jax.block_until_ready(positionwise_feed_forward(x, w1, b1, w2, b2))
    y_ref = _reference(x, w1, b1, w2, b2)
    assert y.shape == x.shape
    assert jnp.allclose(y, y_ref, atol=1e-4, rtol=1e-4), "f32 mismatch vs reference"

    # ---- Test 2: bf16, multiple row tiles, forced d_ff streaming (2 k steps) --------
    batch2, seq2, dm2, df2 = 2, 96, 128, 256              # m = 192 rows
    lim1b = 1.0 / math.sqrt(dm2)
    lim2b = 1.0 / math.sqrt(df2)
    xb = jax.random.normal(k_x2, (batch2, seq2, dm2), dtype=jnp.float32)
    w1b = jax.random.uniform(k_w1, (dm2, df2), jnp.float32, -lim1b, lim1b)
    b1b = jax.random.uniform(k_b1, (df2,), jnp.float32, -lim1b, lim1b)
    w2b = jax.random.uniform(k_w2, (df2, dm2), jnp.float32, -lim2b, lim2b)
    b2b = jax.random.uniform(k_b2, (dm2,), jnp.float32, -lim2b, lim2b)

    yb = positionwise_feed_forward(xb.astype(jnp.bfloat16), w1b, b1b, w2b, b2b,
                                   row_tile=64, dff_tile=128)   # force streamed kernel
    yb = jax.block_until_ready(yb)
    yb_ref = _reference(xb, w1b, b1b, w2b, b2b)
    assert yb.shape == xb.shape and yb.dtype == jnp.bfloat16
    assert jnp.allclose(yb.astype(jnp.float32), yb_ref, atol=0.1, rtol=0.1), \
        "bf16 mismatch vs reference"

    print("KERNEL_OK")
</pallas_src>

<mosaic_0001>
module attributes {stable_mosaic.version = 11 : i64} {
  func.func @_ffn_kernel_resident(%arg0: i32, %arg1: memref<8x32xf32, #tpu.memory_space<vmem>>, %arg2: memref<32x64xf32, #tpu.memory_space<vmem>>, %arg3: memref<1x64xf32, #tpu.memory_space<vmem>>, %arg4: memref<64x32xf32, #tpu.memory_space<vmem>>, %arg5: memref<1x32xf32, #tpu.memory_space<vmem>>, %arg6: memref<8x32xf32, #tpu.memory_space<vmem>>) attributes {dimension_semantics = [#tpu.dimension_semantics<parallel>], iteration_bounds = array<i64: 2>, scalar_prefetch = 0 : i64, scratch_operands = 0 : i64, tpu.core_type = #tpu.core_type<tc>, window_params = [{transform_indices = @transform_0, window_bounds = array<i64: 8, 32>}, {pipeline_mode = #tpu.pipeline_mode<synchronous>, transform_indices = @transform_1, window_bounds = array<i64: 32, 64>}, {pipeline_mode = #tpu.pipeline_mode<synchronous>, transform_indices = @transform_2, window_bounds = array<i64: 1, 64>}, {pipeline_mode = #tpu.pipeline_mode<synchronous>, transform_indices = @transform_3, window_bounds = array<i64: 64, 32>}, {pipeline_mode = #tpu.pipeline_mode<synchronous>, transform_indices = @transform_4, window_bounds = array<i64: 1, 32>}, {transform_indices = @transform_5, window_bounds = array<i64: 8, 32>}]} {
    %c0 = arith.constant 0 : index
    %c0_0 = arith.constant 0 : index
    %0 = vector.load %arg1[%c0, %c0_0] : memref<8x32xf32, #tpu.memory_space<vmem>>, vector<8x32xf32>
    %c0_1 = arith.constant 0 : index
    %c0_2 = arith.constant 0 : index
    %1 = vector.load %arg2[%c0_1, %c0_2] : memref<32x64xf32, #tpu.memory_space<vmem>>, vector<32x64xf32>
    %cst = arith.constant dense<0.000000e+00> : vector<8x64xf32>
    %2 = tpu.matmul %0, %1, %cst {dimension_numbers = #tpu.dot_dimension_numbers<[1], [0], [0], [1], [0, 0, 1, 1], [], []>} : vector<8x32xf32>, vector<32x64xf32>, vector<8x64xf32> -> vector<8x64xf32>
    %c0_3 = arith.constant 0 : index
    %c0_4 = arith.constant 0 : index
    %3 = vector.load %arg3[%c0_3, %c0_4] : memref<1x64xf32, #tpu.memory_space<vmem>>, vector<1x64xf32>
    %4 = vector.broadcast %3 : vector<1x64xf32> to vector<8x64xf32>
    %5 = arith.addf %2, %4 : vector<8x64xf32>
    %6 = arith.mulf %5, %5 : vector<8x64xf32>
    %cst_5 = arith.constant 0.0356774069 : f32
    %7 = vector.broadcast %cst_5 : f32 to vector<8x64xf32>
    %8 = arith.mulf %7, %6 : vector<8x64xf32>
    %cst_6 = arith.constant 0.797884583 : f32
    %9 = vector.broadcast %cst_6 : f32 to vector<8x64xf32>
    %10 = arith.addf %9, %8 : vector<8x64xf32>
    %11 = arith.mulf %5, %10 : vector<8x64xf32>
    %cst_7 = arith.constant 5.000000e-01 : f32
    %12 = vector.broadcast %cst_7 : f32 to vector<8x64xf32>
    %13 = arith.mulf %12, %5 : vector<8x64xf32>
    %14 = math.tanh %11 : vector<8x64xf32>
    %cst_8 = arith.constant 1.000000e+00 : f32
    %15 = vector.broadcast %cst_8 : f32 to vector<8x64xf32>
    %16 = arith.addf %15, %14 : vector<8x64xf32>
    %17 = arith.mulf %13, %16 : vector<8x64xf32>
    %c0_9 = arith.constant 0 : index
    %c0_10 = arith.constant 0 : index
    %18 = vector.load %arg4[%c0_9, %c0_10] : memref<64x32xf32, #tpu.memory_space<vmem>>, vector<64x32xf32>
    %cst_11 = arith.constant dense<0.000000e+00> : vector<8x32xf32>
    %19 = tpu.matmul %17, %18, %cst_11 {dimension_numbers = #tpu.dot_dimension_numbers<[1], [0], [0], [1], [0, 0, 1, 1], [], []>} : vector<8x64xf32>, vector<64x32xf32>, vector<8x32xf32> -> vector<8x32xf32>
    %c0_12 = arith.constant 0 : index
    %c0_13 = arith.constant 0 : index
    %20 = vector.load %arg5[%c0_12, %c0_13] : memref<1x32xf32, #tpu.memory_space<vmem>>, vector<1x32xf32>
    %21 = vector.broadcast %20 : vector<1x32xf32> to vector<8x32xf32>
    %22 = arith.addf %19, %21 : vector<8x32xf32>
    %c0_14 = arith.constant 0 : index
    %c0_15 = arith.constant 0 : index
    %23 = vector.load %arg6[%c0_14, %c0_15] : memref<8x32xf32, #tpu.memory_space<vmem>>, vector<8x32xf32>
    tpu.vector_store %arg6[%c0_14, %c0_15], %22 {strides = array<i32>} : memref<8x32xf32, #tpu.memory_space<vmem>>, vector<8x32xf32>,
    return
  }
  func.func @transform_0(%arg0: i32) -> (i32, i32) {
    %c0_i32 = arith.constant 0 : i32
    %c0_i32_0 = arith.constant 0 : i32
    return %arg0, %c0_i32 : i32, i32
  }
  func.func @transform_1(%arg0: i32) -> (i32, i32) {
    %c0_i32 = arith.constant 0 : i32
    %c0_i32_0 = arith.constant 0 : i32
    %c0_i32_1 = arith.constant 0 : i32
    return %c0_i32, %c0_i32_0 : i32, i32
  }
  func.func @transform_2(%arg0: i32) -> (i32, i32) {
    %c0_i32 = arith.constant 0 : i32
    %c0_i32_0 = arith.constant 0 : i32
    %c0_i32_1 = arith.constant 0 : i32
    return %c0_i32, %c0_i32_0 : i32, i32
  }
  func.func @transform_3(%arg0: i32) -> (i32, i32) {
    %c0_i32 = arith.constant 0 : i32
    %c0_i32_0 = arith.constant 0 : i32
    %c0_i32_1 = arith.constant 0 : i32
    return %c0_i32, %c0_i32_0 : i32, i32
  }
  func.func @transform_4(%arg0: i32) -> (i32, i32) {
    %c0_i32 = arith.constant 0 : i32
    %c0_i32_0 = arith.constant 0 : i32
    %c0_i32_1 = arith.constant 0 : i32
    return %c0_i32, %c0_i32_0 : i32, i32
  }
  func.func @transform_5(%arg0: i32) -> (i32, i32) {
    %c0_i32 = arith.constant 0 : i32
    %c0_i32_0 = arith.constant 0 : i32
    return %arg0, %c0_i32 : i32, i32
  }
}

</mosaic_0001>

<llo_original>
// kernel: tpu_custom_call.1
$region0: #{tpu_custom_call.1}
  #allocation0 [shape = 'u32[]', space=smem, size = 0x4, offset = 0x4, fixed_abs, tag = 'smem constant byte address 0x4 - core index']
  #allocation1 [shape = 'u32[144,128]{1,0:T(1,128)}', space=vmem, size = 0x12000, scoped, tag = 'internal scratch']
  %s0 = inlined_call_operand.vmem [shape: f32[16,32], index: 0, kind: input, shape index: {}]
  %s1 = inlined_call_operand.vmem [shape: f32[32,64], index: 1, kind: input, shape index: {}]
  %s2 = inlined_call_operand.vmem [shape: f32[1,64], index: 2, kind: input, shape index: {}]
  %s3 = inlined_call_operand.vmem [shape: f32[64,32], index: 3, kind: input, shape index: {}]
  %s4 = inlined_call_operand.vmem [shape: f32[1,32], index: 4, kind: input, shape index: {}]
  %s5 = inlined_call_operand.hbm [shape: f32[16,32], index: 5, kind: output, shape index: {}]
  %s6 = sld [smem:[#allocation0]]
  $region53: #{tpu_custom_call.1} parent=0
    _
  %s8 = ssub.s32 1, %s6
  %s9 = scalar_select 0, %s8, %s6
  $region1: #{tpu_custom_call.1} parent=0
    #allocation2 [shape = 'u8[8192]{0}', space=vmem, size = 0x2000, scoped, tag = 'output window, operand 0']
    #allocation3 [shape = 's32[2]{0}', space=sflag, size = 0x8, scoped, tag = 'scoped memory for tpu_custom_call.1']
    %10 = vsyncpa [#allocation3], 0
    %s11 = scalar_lea.sflag [#allocation3], 1
    %12 = vsyncpa %s11, 0
    loop: start=0, step=1, limit=4
    $region2: #{tpu_custom_call.1} parent=1 // loop_pre_header
      _
    $region3: #{tpu_custom_call.1} parent=1 // loop_header
      %s14 = sphi 0, %s18
      %p15 = scmp.ge.s32.totalorder %s14, 4
      %s24 = sphi 0, %s26
      %s27 = sphi 0, %s24
      %s28 = sphi 0, %s27
      %s44 = sphi 0, %s28
      %s48 = sphi 0, %s48
      %s50 = sphi 0, %s48
      %s51 = sphi 0, %s50
      %s65 = sphi 0, %s51
      %s69 = sphi 0, %s69
      %s71 = sphi 0, %s69
      %s72 = sphi 0, %s71
      %s86 = sphi 0, %s72
      %s90 = sphi 0, %s90
      %s92 = sphi 0, %s90
      %s93 = sphi 0, %s92
      %s107 = sphi 0, %s93
      %s111 = sphi 0, %s111
      %s113 = sphi 0, %s111
      %s114 = sphi 0, %s113
      %s128 = sphi 0, %s114
      %s134 = sphi 0, %s136
      %s137 = sphi 0, %s134
      %s138 = sphi 0, %s137
      %s154 = sphi 0, %s138
    $region4: #{tpu_custom_call.1} parent=1 // loop_header_branch
      %17 = sbr.rel (%p15) target = $region8
    $region5: #{tpu_custom_call.1} parent=1 // loop_body
      %s19 = ssub.s32 %s14, 1
      %s20 = ssub.s32 %s14, 2
      %s21 = sadd.s32 %s14, 1
      %s22 = ssub.s32 %s14, %s21
      %p23 = scmp.eq.s32.totalorder %s22, 0
      %s25 = sadd.s32 %s24, 1
      %s26 = scalar_select %p23, %s24, %s25
      %p29 = pneg %p23
      %p30 = scmp.eq.s32.totalorder %s14, 1
      %p31 = por %p29, %p30
      %p32 = scmp.ne.s32.totalorder %s24, %s27
      %p33 = scmp.eq.s32.totalorder %s14, 0
      %p34 = por %p32, %p33
      %p35 = scmp.ne.s32.totalorder %s24, %s27
      %p36 = scmp.eq.s32.totalorder %s19, 1
      %p37 = por %p35, %p36
      %p38 = scmp.ne.s32.totalorder %s27, %s28
      %p39 = scmp.eq.s32.totalorder %s19, 0
      %p40 = por %p38, %p39
      %p41 = scmp.ne.s32.totalorder %s27, %s28
      %p42 = scmp.eq.s32.totalorder %s20, 1
      %p43 = por %p41, %p42
      %p45 = scmp.ne.s32.totalorder %s28, %s44
      %p46 = scmp.eq.s32.totalorder %s20, 0
      %p47 = por %p45, %p46
      %s49 = sadd.s32 %s48, 1
      %p52 = scmp.eq.s32.totalorder %s14, 1
      %p53 = scmp.ne.s32.totalorder %s48, %s50
      %p54 = scmp.eq.s32.totalorder %s14, 0
      %p55 = por %p53, %p54
      %p56 = scmp.ne.s32.totalorder %s48, %s50
      %p57 = scmp.eq.s32.totalorder %s19, 1
      %p58 = por %p56, %p57
      %p59 = scmp.ne.s32.totalorder %s50, %s51
      %p60 = scmp.eq.s32.totalorder %s19, 0
      %p61 = por %p59, %p60
      %p62 = scmp.ne.s32.totalorder %s50, %s51
      %p63 = scmp.eq.s32.totalorder %s20, 1
      %p64 = por %p62, %p63
      %p66 = scmp.ne.s32.totalorder %s51, %s65
      %p67 = scmp.eq.s32.totalorder %s20, 0
      %p68 = por %p66, %p67
      %s70 = sadd.s32 %s69, 1
      %p73 = scmp.eq.s32.totalorder %s14, 1
      %p74 = scmp.ne.s32.totalorder %s69, %s71
      %p75 = scmp.eq.s32.totalorder %s14, 0
      %p76 = por %p74, %p75
      %p77 = scmp.ne.s32.totalorder %s69, %s71
      %p78 = scmp.eq.s32.totalorder %s19, 1
      %p79 = por %p77, %p78
      %p80 = scmp.ne.s32.totalorder %s71, %s72
      %p81 = scmp.eq.s32.totalorder %s19, 0
      %p82 = por %p80, %p81
      %p83 = scmp.ne.s32.totalorder %s71, %s72
      %p84 = scmp.eq.s32.totalorder %s20, 1
      %p85 = por %p83, %p84
      %p87 = scmp.ne.s32.totalorder %s72, %s86
      %p88 = scmp.eq.s32.totalorder %s20, 0
      %p89 = por %p87, %p88
      %s91 = sadd.s32 %s90, 1
      %p94 = scmp.eq.s32.totalorder %s14, 1
      %p95 = scmp.ne.s32.totalorder %s90, %s92
      %p96 = scmp.eq.s32.totalorder %s14, 0
      %p97 = por %p95, %p96
      %p98 = scmp.ne.s32.totalorder %s90, %s92
      %p99 = scmp.eq.s32.totalorder %s19, 1
      %p100 = por %p98, %p99
      %p101 = scmp.ne.s32.totalorder %s92, %s93
      %p102 = scmp.eq.s32.totalorder %s19, 0
      %p103 = por %p101, %p102
      %p104 = scmp.ne.s32.totalorder %s92, %s93
      %p105 = scmp.eq.s32.totalorder %s20, 1
      %p106 = por %p104, %p105
      %p108 = scmp.ne.s32.totalorder %s93, %s107
      %p109 = scmp.eq.s32.totalorder %s20, 0
      %p110 = por %p108, %p109
      %s112 = sadd.s32 %s111, 1
      %p115 = scmp.eq.s32.totalorder %s14, 1
      %p116 = scmp.ne.s32.totalorder %s111, %s113
      %p117 = scmp.eq.s32.totalorder %s14, 0
      %p118 = por %p116, %p117
      %p119 = scmp.ne.s32.totalorder %s111, %s113
      %p120 = scmp.eq.s32.totalorder %s19, 1
      %p121 = por %p119, %p120
      %p122 = scmp.ne.s32.totalorder %s113, %s114
      %p123 = scmp.eq.s32.totalorder %s19, 0
      %p124 = por %p122, %p123
      %p125 = scmp.ne.s32.totalorder %s113, %s114
      %p126 = scmp.eq.s32.totalorder %s20, 1
      %p127 = por %p125, %p126
      %p129 = scmp.ne.s32.totalorder %s114, %s128
      %p130 = scmp.eq.s32.totalorder %s20, 0
      %p131 = por %p129, %p130
      %s132 = ssub.s32 %s14, %s21
      %p133 = scmp.eq.s32.totalorder %s132, 0
      %s135 = sadd.s32 %s134, 1
      %s136 = scalar_select %p133, %s134, %s135
      %p139 = pneg %p133
      %p140 = scmp.eq.s32.totalorder %s14, 1
      %p141 = por %p139, %p140
      %p142 = scmp.ne.s32.totalorder %s134, %s137
      %p143 = scmp.eq.s32.totalorder %s14, 0
      %p144 = por %p142, %p143
      %p145 = scmp.ne.s32.totalorder %s134, %s137
      %p146 = scmp.eq.s32.totalorder %s19, 1
      %p147 = por %p145, %p146
      %p148 = scmp.ne.s32.totalorder %s137, %s138
      %p149 = scmp.eq.s32.totalorder %s19, 0
      %p150 = por %p148, %p149
      %p151 = scmp.ne.s32.totalorder %s137, %s138
      %p152 = scmp.eq.s32.totalorder %s20, 1
      %p153 = por %p151, %p152
      %p155 = scmp.ne.s32.totalorder %s138, %s154
      %p156 = scmp.eq.s32.totalorder %s20, 0
      %p157 = por %p155, %p156
      %p158 = scmp.le.s32.totalorder 1, %s14
      %p159 = scmp.lt.s32.totalorder %s14, 3
      %p160 = pnand %p158, %p159
      %p161 = pneg %p160
      // Predicated region
      $region9: #{tpu_custom_call.1} parent=5 // pred_check
        _
      $region10: #{tpu_custom_call.1} parent=5 // pred_check_branch
        %163 = sbr.rel (%p160) target = $region12
      $region11: #{tpu_custom_call.1} parent=5 // pred_region
        %s164 = ssub.s32 %s14, 1
        // Predicated region
        $region13: #{tpu_custom_call.1} parent=11 // pred_check
          %p165 = pneg %p61
        $region14: #{tpu_custom_call.1} parent=11 // pred_check_branch
          %167 = sbr.rel (%p165) target = $region16
        $region15: #{tpu_custom_call.1} parent=11 // pred_region
          _
        $region16: #{tpu_custom_call.1} parent=11 // pred_fallthru
          _
        // Predicated region
        $region17: #{tpu_custom_call.1} parent=11 // pred_check
          %p168 = pneg %p82
        $region18: #{tpu_custom_call.1} parent=11 // pred_check_branch
          %170 = sbr.rel (%p168) target = $region20
        $region19: #{tpu_custom_call.1} parent=11 // pred_region
          _
        $region20: #{tpu_custom_call.1} parent=11 // pred_fallthru
          _
        // Predicated region
        $region21: #{tpu_custom_call.1} parent=11 // pred_check
          %p171 = pneg %p103
        $region22: #{tpu_custom_call.1} parent=11 // pred_check_branch
          %173 = sbr.rel (%p171) target = $region24
        $region23: #{tpu_custom_call.1} parent=11 // pred_region
          _
        $region24: #{tpu_custom_call.1} parent=11 // pred_fallthru
          _
        // Predicated region
        $region25: #{tpu_custom_call.1} parent=11 // pred_check
          %p174 = pneg %p124
        $region26: #{tpu_custom_call.1} parent=11 // pred_check_branch
          %176 = sbr.rel (%p174) target = $region28
        $region27: #{tpu_custom_call.1} parent=11 // pred_region
          _
        $region28: #{tpu_custom_call.1} parent=11 // pred_fallthru
          _
      $region12: #{tpu_custom_call.1} parent=5 // pred_fallthru
        _
      %p177 = scmp.lt.s32.totalorder %s14, 2
      // Predicated region
      $region29: #{tpu_custom_call.1} parent=5 // pred_check
        %p178 = pneg %p177
      $region30: #{tpu_custom_call.1} parent=5 // pred_check_branch
        %180 = sbr.rel (%p178) target = $region32
      $region31: #{tpu_custom_call.1} parent=5 // pred_region
        // Predicated region
        $region33: #{tpu_custom_call.1} parent=31 // pred_check
          %p181 = pneg %p34
        $region34: #{tpu_custom_call.1} parent=31 // pred_check_branch
          %183 = sbr.rel (%p181) target = $region36
        $region35: #{tpu_custom_call.1} parent=31 // pred_region
          %p184 = scmp.lt.s32.totalorder %s14, 1
          %s185 = scalar_select %p184, %s14, 1
          %s186 = smul.addr %s185, 8
          %s187 = scalar_lea.vmem %s0, %s186
        $region36: #{tpu_custom_call.1} parent=31 // pred_fallthru
          _
      $region32: #{tpu_custom_call.1} parent=5 // pred_fallthru
        _
      %p188 = scmp.le.s32.totalorder 1, %s14
      %p189 = scmp.lt.s32.totalorder %s14, 3
      %p190 = pnand %p188, %p189
      %p191 = pneg %p190
      // Predicated region
      $region37: #{tpu_custom_call.1} parent=5 // pred_check
        _
      $region38: #{tpu_custom_call.1} parent=5 // pred_check_branch
        %193 = sbr.rel (%p190) target = $region40
      $region39: #{tpu_custom_call.1} parent=5 // pred_region
        %s194 = ssub.s32 %s14, 1
        %p195 = scmp.lt.s32.totalorder %s19, 1
        %s196 = scalar_select %p195, %s19, 1
        %s197 = smul.addr %s196, 8
        %s198 = scalar_lea.vmem %s0, %s197
        %p199 = pneg %p40
        %p200 = pneg %p37
        %p201 = pneg %p61
        %p202 = pneg %p58
        %p203 = pneg %p82
        %p204 = pneg %p79
        %p205 = pneg %p103
        %p206 = pneg %p100
        %p207 = pneg %p124
        %p208 = pneg %p121
        %p209 = pneg %p150
        %p210 = pneg %p147
        %s211 = sand.u32 %s137, 1
        %s212 = scalar_lea.sflag [#allocation3], %s211
        %s213 = sand.u32 %s137, 1
        %s214 = smul.addr %s213, 8
        %s215 = scalar_lea.vmem [#allocation2], %s214
        %p216 = scmp.lt.s32.totalorder %s19, 1
        %s217 = scalar_select %p216, %s19, 1
        %s218 = smul.addr %s217, 8
        %s219 = scalar_lea.vmem %s0, %s218
        %v220 = vld [vmem:[%s219] sm:$0xff]
        %v221 = vld [vmem:[%s1] sm:$0xff]
        %v222 = vld [vmem:[%s1 + $0x8] sm:$0xff]
        %v223 = vld [vmem:[%s1 + $0x10] sm:$0xff]
        %v224 = vld [vmem:[%s1 + $0x18] sm:$0xff]
        %v225 = vld [vmem:[%s2] sm:$0x1]
        %v227 = vlaneseq
        %v228 = vshrl.u32 %v227, 7
        %v229 = vsub.s32 0, %v228
        %v230 = vrot.slane %v225, %v229
        %vm232 = vcmask 261120
        %v234 = vsel %vm232, %v220, 0
        %236 = vmatprep.subr.mxu0 0.0
        %237 = vmatpush1.msra.mxu0 0.0
        %238 = vmatprep.subr.mxu0 0.0
        %239 = vmatpush1.msra.mxu0 0.0
        %240 = vmatprep.subr.mxu0 0.0
        %241 = vmatpush1.msra.mxu0 0.0
        %242 = vmatprep.subr.mxu0 0.0
        %243 = vmatpush1.msra.mxu0 0.0
        %244 = vmatprep.subr.mxu0 0.0
        %245 = vmatpush1.msra.mxu0 0.0
        %246 = vmatprep.subr.mxu0 0.0
        %247 = vmatpush1.msra.mxu0 0.0
        %248 = vmatprep.subr.mxu0 0.0
        %249 = vmatpush1.msra.mxu0 0.0
        %250 = vmatprep.subr.mxu0 0.0
        %251 = vmatpush1.msra.mxu0 0.0
        %252 = vmatprep.subr.mxu0 0.0
        %253 = vmatpush1.msra.mxu0 0.0
        %254 = vmatprep.subr.mxu0 0.0
        %255 = vmatpush1.msra.mxu0 0.0
        %256 = vmatprep.subr.mxu0 0.0
        %257 = vmatpush1.msra.mxu0 0.0
        %258 = vmatprep.subr.mxu0 0.0
        %259 = vmatpush1.msra.mxu0 0.0
        %260 = vmatprep.subr.mxu0 0.0
        %261 = vmatpush1.msra.mxu0 %v224
        %262 = vmatprep.subr.mxu0 0.0
        %263 = vmatpush1.msra.mxu0 %v223
        %264 = vmatprep.subr.mxu0 0.0
        %265 = vmatpush1.msra.mxu0 %v222
        %266 = vmatprep.subr.mxu0 0.0
        %267 = vmatpush1.msra.mxu0 %v221
        %268 = vmatprep.subr.mxu0 0.0
        %269 = vmatpush2.msra.mxu0 0.0
        %270 = vmatprep.subr.mxu0 0.0
        %271 = vmatpush2.msra.mxu0 0.0
        %272 = vmatprep.subr.mxu0 0.0
        %273 = vmatpush2.msra.mxu0 0.0
        %274 = vmatprep.subr.mxu0 0.0
        %275 = vmatpush2.msra.mxu0 0.0
        %276 = vmatprep.subr.mxu0 0.0
        %277 = vmatpush2.msra.mxu0 0.0
        %278 = vmatprep.subr.mxu0 0.0
        %279 = vmatpush2.msra.mxu0 0.0
        %280 = vmatprep.subr.mxu0 0.0
        %281 = vmatpush2.msra.mxu0 0.0
        %282 = vmatprep.subr.mxu0 0.0
        %283 = vmatpush2.msra.mxu0 0.0
        %284 = vmatprep.subr.mxu0 0.0
        %285 = vmatpush2.msra.mxu0 0.0
        %286 = vmatprep.subr.mxu0 0.0
        %287 = vmatpush2.msra.mxu0 0.0
        %288 = vmatprep.subr.mxu0 0.0
        %289 = vmatpush2.msra.mxu0 0.0
        %290 = vmatprep.subr.mxu0 0.0
        %291 = vmatpush2.msra.mxu0 0.0
        %292 = vmatprep.subr.mxu0 0.0
        %293 = vmatpush2.msra.mxu0 0.0
        %294 = vmatprep.subr.mxu0 0.0
        %295 = vmatpush2.msra.mxu0 0.0
        %296 = vmatprep.subr.mxu0 0.0
        %297 = vmatpush2.msra.mxu0 0.0
        %298 = vmatprep.subr.mxu0 0.0
        %299 = vmatpush2.msra.mxu0 0.0
        %300 = vmatprep.mubr.f32.mxu0 0.0
        %301 = vmatmul.mubr.f32.gmra.mxu0 %v234
        %v302 = vpop.f32.mrf.mxu0
        %v303 = vadd.f32 %v230, %v302
        %v304 = vpop.f32.mrf.mxu0
        %305 = vdwg.mxu0
        %v306 = vmul.f32 %v303, %v303
        %v307 = vmul.f32 %v306, 0.035677407
        %v308 = vadd.f32 %v307, 0.7978846
        %v309 = vmul.f32 %v303, %v308
        %v310 = vmul.f32 %v303, 0.5
        %v311 = vtanh.pop %v309
        %v312 = vadd.f32 %v311, 1.0
        %v313 = vmul.f32 %v310, %v312
        %v314 = vld [vmem:[%s3] sm:$0xff]
        %v315 = vld [vmem:[%s3 + $0x8] sm:$0xff]
        %v316 = vld [vmem:[%s3 + $0x10] sm:$0xff]
        %v317 = vld [vmem:[%s3 + $0x18] sm:$0xff]
        %v318 = vld [vmem:[%s3 + $0x20] sm:$0xff]
        %v319 = vld [vmem:[%s3 + $0x28] sm:$0xff]
        %v320 = vld [vmem:[%s3 + $0x30] sm:$0xff]
        %v321 = vld [vmem:[%s3 + $0x38] sm:$0xff]
        %v322 = vld [vmem:[%s4] sm:$0x1]
        %v324 = vlaneseq
        %v325 = vshrl.u32 %v324, 7
        %v326 = vsub.s32 0, %v325
        %v327 = vrot.slane %v322, %v326
        %vm329 = vcmask 523264
        %v331 = vsel %vm329, %v313, 0
        %333 = vmatprep.subr.mxu0 0.0
        %334 = vmatpush1.msra.mxu0 0.0
        %335 = vmatprep.subr.mxu0 0.0
        %336 = vmatpush1.msra.mxu0 0.0
        %337 = vmatprep.subr.mxu0 0.0
        %338 = vmatpush1.msra.mxu0 0.0
        %339 = vmatprep.subr.mxu0 0.0
        %340 = vmatpush1.msra.mxu0 0.0
        %341 = vmatprep.subr.mxu0 0.0
        %342 = vmatpush1.msra.mxu0 0.0
        %343 = vmatprep.subr.mxu0 0.0
        %344 = vmatpush1.msra.mxu0 0.0
        %345 = vmatprep.subr.mxu0 0.0
        %346 = vmatpush1.msra.mxu0 0.0
        %347 = vmatprep.subr.mxu0 0.0
        %348 = vmatpush1.msra.mxu0 0.0
        %349 = vmatprep.subr.mxu0 0.0
        %350 = vmatpush1.msra.mxu0 %v321
        %351 = vmatprep.subr.mxu0 0.0
        %352 = vmatpush1.msra.mxu0 %v320
        %353 = vmatprep.subr.mxu0 0.0
        %354 = vmatpush1.msra.mxu0 %v319
        %355 = vmatprep.subr.mxu0 0.0
        %356 = vmatpush1.msra.mxu0 %v318
        %357 = vmatprep.subr.mxu0 0.0
        %358 = vmatpush1.msra.mxu0 %v317
        %359 = vmatprep.subr.mxu0 0.0
        %360 = vmatpush1.msra.mxu0 %v316
        %361 = vmatprep.subr.mxu0 0.0
        %362 = vmatpush1.msra.mxu0 %v315
        %363 = vmatprep.subr.mxu0 0.0
        %364 = vmatpush1.msra.mxu0 %v314
        %365 = vmatprep.subr.mxu0 0.0
        %366 = vmatpush2.msra.mxu0 0.0
        %367 = vmatprep.subr.mxu0 0.0
        %368 = vmatpush2.msra.mxu0 0.0
        %369 = vmatprep.subr.mxu0 0.0
        %370 = vmatpush2.msra.mxu0 0.0
        %371 = vmatprep.subr.mxu0 0.0
        %372 = vmatpush2.msra.mxu0 0.0
        %373 = vmatprep.subr.mxu0 0.0
        %374 = vmatpush2.msra.mxu0 0.0
        %375 = vmatprep.subr.mxu0 0.0
        %376 = vmatpush2.msra.mxu0 0.0
        %377 = vmatprep.subr.mxu0 0.0
        %378 = vmatpush2.msra.mxu0 0.0
        %379 = vmatprep.subr.mxu0 0.0
        %380 = vmatpush2.msra.mxu0 0.0
        %381 = vmatprep.subr.mxu0 0.0
        %382 = vmatpush2.msra.mxu0 0.0
        %383 = vmatprep.subr.mxu0 0.0
        %384 = vmatpush2.msra.mxu0 0.0
        %385 = vmatprep.subr.mxu0 0.0
        %386 = vmatpush2.msra.mxu0 0.0
        %387 = vmatprep.subr.mxu0 0.0
        %388 = vmatpush2.msra.mxu0 0.0
        %389 = vmatprep.subr.mxu0 0.0
        %390 = vmatpush2.msra.mxu0 0.0
        %391 = vmatprep.subr.mxu0 0.0
        %392 = vmatpush2.msra.mxu0 0.0
        %393 = vmatprep.subr.mxu0 0.0
        %394 = vmatpush2.msra.mxu0 0.0
        %395 = vmatprep.subr.mxu0 0.0
        %396 = vmatpush2.msra.mxu0 0.0
        %397 = vmatprep.mubr.f32.mxu0 0.0
        %398 = vmatmul.mubr.f32.gmra.mxu0 %v331
        %v399 = vpop.f32.mrf.mxu0
        %v400 = vadd.f32 %v327, %v399
        %v401 = vpop.f32.mrf.mxu0
        %402 = vdwg.mxu0
        %403 = vst.msk [vmem:[%s215] sm:$0xff] %vm232, %v400
        %s404 = sand.u32 %s137, 1
        %s405 = scalar_lea.sflag [#allocation3], %s404
        %s406 = sand.u32 %s137, 1
        %s407 = smul.addr %s406, 8
        %s408 = scalar_lea.vmem [#allocation2], %s407
        // Predicated region
        $region41: #{tpu_custom_call.1} parent=39 // pred_check
          %p409 = pneg %p147
        $region42: #{tpu_custom_call.1} parent=39 // pred_check_branch
          %411 = sbr.rel (%p409) target = $region44
        $region43: #{tpu_custom_call.1} parent=39 // pred_region
          %s413 = ssub.s32 128, 128
          %414 = vsyncadd %s405, %s413
          %s415 = smul.addr %s19, 128
          %s416 = scalar_lea.hbm %s5, %s415
          %s418 = sshll.u32 %s408, 4
          %s419 = int_to_ptr.vmem [resolvable:$true] %s418
          %421 = dma.vmem_to_hbm [thread:$0]  %s419, 128, %s416, %s405
        $region44: #{tpu_custom_call.1} parent=39 // pred_fallthru
          _
      $region40: #{tpu_custom_call.1} parent=5 // pred_fallthru
        _
      %p422 = scmp.le.s32.totalorder 2, %s14
      // Predicated region
      $region45: #{tpu_custom_call.1} parent=5 // pred_check
        %p423 = pneg %p422
      $region46: #{tpu_custom_call.1} parent=5 // pred_check_branch
        %425 = sbr.rel (%p423) target = $region48
      $region47: #{tpu_custom_call.1} parent=5 // pred_region
        %s426 = ssub.s32 %s14, 2
        // Predicated region
        $region49: #{tpu_custom_call.1} parent=47 // pred_check
          %p427 = pneg %p153
        $region50: #{tpu_custom_call.1} parent=47 // pred_check_branch
          %429 = sbr.rel (%p427) target = $region52
        $region51: #{tpu_custom_call.1} parent=47 // pred_region
          %s430 = sand.u32 %s138, 1
          %s431 = scalar_lea.sflag [#allocation3], %s430
          %s432 = sand.u32 %s138, 1
          %s433 = smul.addr %s432, 8
          %s434 = scalar_lea.vmem [#allocation2], %s433
          %435 = dma.done %s431, 128
        $region52: #{tpu_custom_call.1} parent=47 // pred_fallthru
          _
      $region48: #{tpu_custom_call.1} parent=5 // pred_fallthru
        _
    $region6: #{tpu_custom_call.1} parent=1 // loop_footer
      %s18 = sadd.s32 1, %s14
    $region7: #{tpu_custom_call.1} parent=1 // loop_footer_branch
      %13 = sbr.rel target = $region3
    $region8: #{tpu_custom_call.1} parent=1 // loop_exit
      _
    %436 = vsyncpa [#allocation3], 1
    %s437 = scalar_lea.sflag [#allocation3], 1
    %438 = vsyncpa %s437, 1

</llo_original>
